<compile_context>
chip_gen: v6e
topology: v6e:2x2x1
jax: 0.10.0
libtpu: 0.0.40
codegen_flags: <defaults>
</compile_context>

<pallas_src>
import math

import jax
import jax.numpy as jnp
from jax.experimental import pallas as pl
from jax.experimental.pallas import tpu as pltpu


_VMEM_BLOCK_BUDGET = 32 * 1024 * 1024   # target footprint of live pipeline blocks
_VMEM_LIMIT_BYTES = 48 * 1024 * 1024    # scoped-VMEM limit requested from Mosaic


def _linear_kernel_whole_k(x_ref, w_ref, b_ref, o_ref):
    """One (tm, tn) output tile, full-K contraction in a single MXU pass.

    x_ref: (tm, K)   activations
    w_ref: (K, tn)   weight, already transposed to [in, out]
    b_ref: (1, tn)   bias
    o_ref: (tm, tn)  output
    """
    acc = jnp.dot(x_ref[...], w_ref[...], preferred_element_type=jnp.float32)
    o_ref[...] = (acc + b_ref[...].astype(jnp.float32)).astype(o_ref.dtype)


def _linear_kernel_ktiled(x_ref, w_ref, b_ref, o_ref, acc_ref):
    """One (tm, tn) output tile; K reduction over grid axis 2 with f32 scratch."""
    k = pl.program_id(2)

    @pl.when(k == 0)
    def _():
        acc_ref[...] = jnp.zeros_like(acc_ref)

    acc_ref[...] += jnp.dot(x_ref[...], w_ref[...],
                            preferred_element_type=jnp.float32)

    @pl.when(k == pl.num_programs(2) - 1)
    def _():
        o_ref[...] = (acc_ref[...] + b_ref[...].astype(jnp.float32)).astype(o_ref.dtype)


def _round_up(a, b):
    return ((a + b - 1) // b) * b


def _sublane(itemsize):
    # f32 -> 8, bf16/f16 -> 16, int8/fp8 -> 32 (second-minor tiling).
    return max(8, 32 // itemsize)


def _choose_tile(dim_pad, align, cap, min_divisor):
    """Pick a tile for `dim_pad` (already a multiple of `align`).

    Prefers (a) a single tile if dim_pad <= cap, else (b) the largest divisor of
    dim_pad in [min_divisor, cap] that is a multiple of align (-> no extra
    padding), else (c) tile = cap with dim padded up to a multiple of cap.
    Returns (tile, padded_dim).
    """
    cap = max(align, (min(cap, dim_pad) // align) * align)
    if dim_pad <= cap:
        return dim_pad, dim_pad
    lo = max(align, min_divisor)
    t = cap
    while t >= lo:
        if dim_pad % t == 0:
            return t, dim_pad
        t -= align
    return cap, _round_up(dim_pad, cap)


def _plan(M, K, N, x_isz, w_isz, o_isz):
    """Static (Python-level) tile / padding plan."""
    sub_x = _sublane(x_isz)
    m_pad = _round_up(M, sub_x)
    k_pad = _round_up(K, 128)          # lane dim of x, sublane dim of W^T
    n_pad = _round_up(N, 128)          # lane dim of W^T / output

    # Keep N in a single lane-dense tile so X streams from HBM exactly once
    # (probe outputs are small); only split truly huge N.
    if n_pad <= 4096:
        tn = n_pad
    else:
        tn, n_pad = _choose_tile(n_pad, 128, 2048, min_divisor=1024)
    bias_bytes = 2 * n_pad * w_isz

    # ---- Path A: whole-K blocks (no reduction grid axis, no accumulator). ----
    for tm_cap in (512, 256, 128, 64, 32, 16, 8):
        if tm_cap < sub_x:
            continue
        tm, m_try = _choose_tile(m_pad, sub_x, tm_cap,
                                 min_divisor=max(sub_x, tm_cap // 2))
        fp = (2 * tm * k_pad * x_isz        # x blocks (double-buffered)
              + 2 * k_pad * tn * w_isz      # W^T blocks
              + 2 * tm * tn * o_isz         # output blocks
              + bias_bytes)
        if fp <= _VMEM_BLOCK_BUDGET:
            return dict(whole_k=True, tm=tm, tn=tn, tk=k_pad,
                        m_pad=m_try, n_pad=n_pad, k_pad=k_pad)

    # ---- Path B: K-tiled reduction with an f32 VMEM accumulator. ----
    tk_caps = (2048, 1024, 512, 256, 128) if x_isz <= 2 else (1024, 512, 256, 128)
    for tm_cap in (512, 256, 128, 64, 32, 16, 8):
        if tm_cap < sub_x:
            continue
        tm, m_try = _choose_tile(m_pad, sub_x, tm_cap,
                                 min_divisor=max(sub_x, tm_cap // 2))
        for tk_cap in tk_caps:
            tk, k_try = _choose_tile(k_pad, 128, tk_cap,
                                     min_divisor=max(128, tk_cap // 2))
            fp = (2 * tm * tk * x_isz
                  + 2 * tk * tn * w_isz
                  + 2 * tm * tn * o_isz
                  + tm * tn * 4              # f32 accumulator scratch
                  + bias_bytes)
            if fp <= _VMEM_BLOCK_BUDGET:
                return dict(whole_k=False, tm=tm, tn=tn, tk=tk,
                            m_pad=m_try, n_pad=n_pad, k_pad=k_try)

    # Last-resort minimal tiles (always fits for sane shapes).
    return dict(whole_k=False, tm=sub_x, tn=tn, tk=128,
                m_pad=m_pad, n_pad=n_pad, k_pad=k_pad)


@jax.jit
def linear_probe_forward(x, weight, bias):
    """x: [..., K], weight: [N, K] (PyTorch convention), bias: [N] -> [..., N]."""
    orig_shape = x.shape
    K = orig_shape[-1]
    N, K2 = weight.shape
    assert K == K2, "input feature mismatch"

    x2d = x.reshape(-1, K)
    M = x2d.shape[0]

    x_isz = x.dtype.itemsize
    w_isz = weight.dtype.itemsize
    o_isz = x.dtype.itemsize
    p = _plan(M, K, N, x_isz, w_isz, o_isz)
    tm, tn, tk = p["tm"], p["tn"], p["tk"]
    m_pad, n_pad, k_pad = p["m_pad"], p["n_pad"], p["k_pad"]

    # Pad only when the logical shape actually needs it (zero K-padding
    # contributes nothing to the contraction).
    xp = x2d
    if (m_pad, k_pad) != (M, K):
        xp = jnp.pad(x2d, ((0, m_pad - M), (0, k_pad - K)))
    wt = weight
    if (n_pad, k_pad) != (N, K):
        wt = jnp.pad(weight, ((0, n_pad - N), (0, k_pad - K)))
    wt = wt.T                               # [k_pad, n_pad]: plain (m,k)x(k,n) matmul
    bp = bias
    if n_pad != N:
        bp = jnp.pad(bias, (0, n_pad - N))
    bp = bp.reshape(1, n_pad)

    grid_m, grid_n, grid_k = m_pad // tm, n_pad // tn, k_pad // tk

    cost = pl.CostEstimate(
        flops=2 * m_pad * n_pad * k_pad,
        transcendentals=0,
        bytes_accessed=(grid_n * m_pad * k_pad * x_isz     # X streamed once per N tile
                        + grid_m * k_pad * n_pad * w_isz   # W streamed once per M tile
                        + m_pad * n_pad * o_isz
                        + n_pad * bias.dtype.itemsize),
    )

    if p["whole_k"]:
        grid_spec = pltpu.PrefetchScalarGridSpec(
            num_scalar_prefetch=0,
            grid=(grid_m, grid_n),
            in_specs=[
                pl.BlockSpec((tm, k_pad), lambda i, j: (i, 0)),   # activations
                pl.BlockSpec((k_pad, tn), lambda i, j: (0, j)),   # W^T
                pl.BlockSpec((1, tn), lambda i, j: (0, j)),       # bias
            ],
            out_specs=pl.BlockSpec((tm, tn), lambda i, j: (i, j)),
        )
        kernel = _linear_kernel_whole_k
        semantics = ("parallel", "parallel")
    else:
        grid_spec = pltpu.PrefetchScalarGridSpec(
            num_scalar_prefetch=0,
            grid=(grid_m, grid_n, grid_k),
            in_specs=[
                pl.BlockSpec((tm, tk), lambda i, j, k: (i, k)),   # activations
                pl.BlockSpec((tk, tn), lambda i, j, k: (k, j)),   # W^T
                pl.BlockSpec((1, tn), lambda i, j, k: (0, j)),    # bias
            ],
            out_specs=pl.BlockSpec((tm, tn), lambda i, j, k: (i, j)),
            scratch_shapes=[pltpu.VMEM((tm, tn), jnp.float32)],
        )
        kernel = _linear_kernel_ktiled
        semantics = ("parallel", "parallel", "arbitrary")

    out_p = pl.pallas_call(
        kernel,
        out_shape=jax.ShapeDtypeStruct((m_pad, n_pad), x.dtype),
        grid_spec=grid_spec,
        compiler_params=pltpu.CompilerParams(
            dimension_semantics=semantics,
            vmem_limit_bytes=_VMEM_LIMIT_BYTES,
        ),
        cost_estimate=cost,
    )(xp, wt, bp)

    out = out_p
    if (m_pad, n_pad) != (M, N):
        out = out_p[:M, :N]
    return out.reshape(orig_shape[:-1] + (N,))


def init_linear_params(key, input_size, output_size, dtype=jnp.float32):
    # Match nn.Linear default init: U(-1/sqrt(in), 1/sqrt(in)) for weight and bias.
    kw, kb = jax.random.split(key)
    bound = 1.0 / math.sqrt(input_size)
    weight = jax.random.uniform(
        kw, (output_size, input_size), dtype=dtype, minval=-bound, maxval=bound
    )
    bias = jax.random.uniform(
        kb, (output_size,), dtype=dtype, minval=-bound, maxval=bound
    )
    return weight, bias


if __name__ == "__main__":
    key = jax.random.PRNGKey(0)
    k_x, k_p, k_x2 = jax.random.split(key, 3)

    batch = 4
    input_size = 32
    output_size = 16

    x = jax.random.normal(k_x, (batch, input_size), dtype=jnp.float32)
    weight, bias = init_linear_params(k_p, input_size, output_size)

    out = linear_probe_forward(x, weight, bias)
    out = jax.block_until_ready(out)

    ref = x @ weight.T + bias
    assert out.shape == (batch, output_size)
    assert jnp.allclose(out, ref, atol=1e-5, rtol=1e-5)

    # Non-aligned 3-D input exercises the padding + reshape path.
    x2 = jax.random.normal(k_x2, (2, 5, input_size), dtype=jnp.float32)
    out2 = jax.block_until_ready(linear_probe_forward(x2, weight, bias))
    ref2 = x2 @ weight.T + bias
    assert out2.shape == (2, 5, output_size)
    assert jnp.allclose(out2, ref2, atol=1e-5, rtol=1e-5)

    print("KERNEL_OK")
</pallas_src>

<mosaic_0001>
module attributes {stable_mosaic.version = 11 : i64} {
  func.func @_linear_kernel_whole_k(%arg0: i32, %arg1: i32, %arg2: memref<8x128xf32, #tpu.memory_space<vmem>>, %arg3: memref<128x128xf32, #tpu.memory_space<vmem>>, %arg4: memref<1x128xf32, #tpu.memory_space<vmem>>, %arg5: memref<8x128xf32, #tpu.memory_space<vmem>>) attributes {dimension_semantics = [#tpu.dimension_semantics<parallel>, #tpu.dimension_semantics<parallel>], iteration_bounds = array<i64: 1, 1>, scalar_prefetch = 0 : i64, scratch_operands = 0 : i64, tpu.core_type = #tpu.core_type<tc>, window_params = [{transform_indices = @transform_0, window_bounds = array<i64: 8, 128>}, {transform_indices = @transform_1, window_bounds = array<i64: 128, 128>}, {transform_indices = @transform_2, window_bounds = array<i64: 1, 128>}, {transform_indices = @transform_3, window_bounds = array<i64: 8, 128>}]} {
    %c0 = arith.constant 0 : index
    %c0_0 = arith.constant 0 : index
    %0 = vector.load %arg2[%c0, %c0_0] : memref<8x128xf32, #tpu.memory_space<vmem>>, vector<8x128xf32>
    %c0_1 = arith.constant 0 : index
    %c0_2 = arith.constant 0 : index
    %1 = vector.load %arg3[%c0_1, %c0_2] : memref<128x128xf32, #tpu.memory_space<vmem>>, vector<128x128xf32>
    %cst = arith.constant dense<0.000000e+00> : vector<8x128xf32>
    %2 = tpu.matmul %0, %1, %cst {dimension_numbers = #tpu.dot_dimension_numbers<[1], [0], [0], [1], [0, 0, 1, 1], [], []>} : vector<8x128xf32>, vector<128x128xf32>, vector<8x128xf32> -> vector<8x128xf32>
    %c0_3 = arith.constant 0 : index
    %c0_4 = arith.constant 0 : index
    %3 = vector.load %arg4[%c0_3, %c0_4] : memref<1x128xf32, #tpu.memory_space<vmem>>, vector<1x128xf32>
    %4 = vector.broadcast %3 : vector<1x128xf32> to vector<8x128xf32>
    %5 = arith.addf %2, %4 : vector<8x128xf32>
    %c0_5 = arith.constant 0 : index
    %c0_6 = arith.constant 0 : index
    %6 = vector.load %arg5[%c0_5, %c0_6] : memref<8x128xf32, #tpu.memory_space<vmem>>, vector<8x128xf32>
    tpu.vector_store %arg5[%c0_5, %c0_6], %5 {strides = array<i32>} : memref<8x128xf32, #tpu.memory_space<vmem>>, vector<8x128xf32>,
    return
  }
  func.func @transform_0(%arg0: i32, %arg1: i32) -> (i32, i32) {
    %c0_i32 = arith.constant 0 : i32
    %c0_i32_0 = arith.constant 0 : i32
    return %arg0, %c0_i32 : i32, i32
  }
  func.func @transform_1(%arg0: i32, %arg1: i32) -> (i32, i32) {
    %c0_i32 = arith.constant 0 : i32
    %c0_i32_0 = arith.constant 0 : i32
    return %c0_i32, %arg1 : i32, i32
  }
  func.func @transform_2(%arg0: i32, %arg1: i32) -> (i32, i32) {
    %c0_i32 = arith.constant 0 : i32
    %c0_i32_0 = arith.constant 0 : i32
    return %c0_i32, %arg1 : i32, i32
  }
  func.func @transform_3(%arg0: i32, %arg1: i32) -> (i32, i32) {
    %c0_i32 = arith.constant 0 : i32
    return %arg0, %arg1 : i32, i32
  }
}

</mosaic_0001>

<llo_original>
// kernel: linear_probe_forward.1
$region0: #{linear_probe_forward.1}
  #allocation0 [shape = 'u32[]', space=smem, size = 0x4, offset = 0x4, fixed_abs, tag = 'smem constant byte address 0x4 - core index']
  #allocation1 [shape = 'u32[144,128]{1,0:T(1,128)}', space=vmem, size = 0x12000, scoped, tag = 'internal scratch']
  %s0 = inlined_call_operand.vmem [shape: f32[8,128], index: 0, kind: input, shape index: {}]
  %s1 = inlined_call_operand.vmem [shape: f32[128,128], index: 1, kind: input, shape index: {}]
  %s2 = inlined_call_operand.vmem [shape: f32[1,128], index: 2, kind: input, shape index: {}]
  %s3 = inlined_call_operand.vmem [shape: f32[8,128], index: 3, kind: output, shape index: {}]
  %s4 = sld [smem:[#allocation0]]
  $region22: #{linear_probe_forward.1} parent=0
    _
  %s6 = ssub.s32 1, %s4
  %s7 = scalar_select 0, %s6, %s4
  // Predicated region
  $region2: #{linear_probe_forward.1} parent=0 // pred_check
    _
  $region3: #{linear_probe_forward.1} parent=0 // pred_check_branch
    %9 = sbr.rel (0) target = $region5
  $region4: #{linear_probe_forward.1} parent=0 // pred_region
    _
  $region5: #{linear_probe_forward.1} parent=0 // pred_fallthru
    _
  // Predicated region
  $region6: #{linear_probe_forward.1} parent=0 // pred_check
    _
  $region7: #{linear_probe_forward.1} parent=0 // pred_check_branch
    %11 = sbr.rel (0) target = $region9
  $region8: #{linear_probe_forward.1} parent=0 // pred_region
    _
  $region9: #{linear_probe_forward.1} parent=0 // pred_fallthru
    _
  // Predicated region
  $region10: #{linear_probe_forward.1} parent=0 // pred_check
    _
  $region11: #{linear_probe_forward.1} parent=0 // pred_check_branch
    %13 = sbr.rel (0) target = $region13
  $region12: #{linear_probe_forward.1} parent=0 // pred_region
    _
  $region13: #{linear_probe_forward.1} parent=0 // pred_fallthru
    _
  %v14 = vld [vmem:[%s0] sm:$0xff]
  %v15 = vld [vmem:[%s1] sm:$0xff]
  %v16 = vld [vmem:[%s1 + $0x8] sm:$0xff]
  %v17 = vld [vmem:[%s1 + $0x10] sm:$0xff]
  %v18 = vld [vmem:[%s1 + $0x18] sm:$0xff]
  %v19 = vld [vmem:[%s1 + $0x20] sm:$0xff]
  %v20 = vld [vmem:[%s1 + $0x28] sm:$0xff]
  %v21 = vld [vmem:[%s1 + $0x30] sm:$0xff]
  %v22 = vld [vmem:[%s1 + $0x38] sm:$0xff]
  %v23 = vld [vmem:[%s1 + $0x40] sm:$0xff]
  %v24 = vld [vmem:[%s1 + $0x48] sm:$0xff]
  %v25 = vld [vmem:[%s1 + $0x50] sm:$0xff]
  %v26 = vld [vmem:[%s1 + $0x58] sm:$0xff]
  %v27 = vld [vmem:[%s1 + $0x60] sm:$0xff]
  %v28 = vld [vmem:[%s1 + $0x68] sm:$0xff]
  %v29 = vld [vmem:[%s1 + $0x70] sm:$0xff]
  %v30 = vld [vmem:[%s1 + $0x78] sm:$0xff]
  %v31 = vld [vmem:[%s2] sm:$0x1]
  %v33 = vlaneseq
  %v34 = vshrl.u32 %v33, 7
  %v35 = vsub.s32 0, %v34
  %v36 = vrot.slane %v31, %v35
  %38 = vmatprep.subr.mxu0 0.0
  %39 = vmatpush1.msra.mxu0 %v30
  %40 = vmatprep.subr.mxu0 0.0
  %41 = vmatpush1.msra.mxu0 %v29
  %42 = vmatprep.subr.mxu0 0.0
  %43 = vmatpush1.msra.mxu0 %v28
  %44 = vmatprep.subr.mxu0 0.0
  %45 = vmatpush1.msra.mxu0 %v27
  %46 = vmatprep.subr.mxu0 0.0
  %47 = vmatpush1.msra.mxu0 %v26
  %48 = vmatprep.subr.mxu0 0.0
  %49 = vmatpush1.msra.mxu0 %v25
  %50 = vmatprep.subr.mxu0 0.0
  %51 = vmatpush1.msra.mxu0 %v24
  %52 = vmatprep.subr.mxu0 0.0
  %53 = vmatpush1.msra.mxu0 %v23
  %54 = vmatprep.subr.mxu0 0.0
  %55 = vmatpush1.msra.mxu0 %v22
  %56 = vmatprep.subr.mxu0 0.0
  %57 = vmatpush1.msra.mxu0 %v21
  %58 = vmatprep.subr.mxu0 0.0
  %59 = vmatpush1.msra.mxu0 %v20
  %60 = vmatprep.subr.mxu0 0.0
  %61 = vmatpush1.msra.mxu0 %v19
  %62 = vmatprep.subr.mxu0 0.0
  %63 = vmatpush1.msra.mxu0 %v18
  %64 = vmatprep.subr.mxu0 0.0
  %65 = vmatpush1.msra.mxu0 %v17
  %66 = vmatprep.subr.mxu0 0.0
  %67 = vmatpush1.msra.mxu0 %v16
  %68 = vmatprep.subr.mxu0 0.0
  %69 = vmatpush1.msra.mxu0 %v15
  %70 = vmatprep.subr.mxu0 0.0
  %71 = vmatpush2.msra.mxu0 0.0
  %72 = vmatprep.subr.mxu0 0.0
  %73 = vmatpush2.msra.mxu0 0.0
  %74 = vmatprep.subr.mxu0 0.0
  %75 = vmatpush2.msra.mxu0 0.0
  %76 = vmatprep.subr.mxu0 0.0
  %77 = vmatpush2.msra.mxu0 0.0
  %78 = vmatprep.subr.mxu0 0.0
  %79 = vmatpush2.msra.mxu0 0.0
  %80 = vmatprep.subr.mxu0 0.0
  %81 = vmatpush2.msra.mxu0 0.0
  %82 = vmatprep.subr.mxu0 0.0
  %83 = vmatpush2.msra.mxu0 0.0
  %84 = vmatprep.subr.mxu0 0.0
  %85 = vmatpush2.msra.mxu0 0.0
  %86 = vmatprep.subr.mxu0 0.0
  %87 = vmatpush2.msra.mxu0 0.0
  %88 = vmatprep.subr.mxu0 0.0
  %89 = vmatpush2.msra.mxu0 0.0
  %90 = vmatprep.subr.mxu0 0.0
  %91 = vmatpush2.msra.mxu0 0.0
  %92 = vmatprep.subr.mxu0 0.0
  %93 = vmatpush2.msra.mxu0 0.0
  %94 = vmatprep.subr.mxu0 0.0
  %95 = vmatpush2.msra.mxu0 0.0
  %96 = vmatprep.subr.mxu0 0.0
  %97 = vmatpush2.msra.mxu0 0.0
  %98 = vmatprep.subr.mxu0 0.0
  %99 = vmatpush2.msra.mxu0 0.0
  %100 = vmatprep.subr.mxu0 0.0
  %101 = vmatpush2.msra.mxu0 0.0
  %102 = vmatprep.mubr.f32.mxu0 0.0
  %103 = vmatmul.mubr.f32.gmra.mxu0 %v14
  %v104 = vpop.f32.mrf.mxu0
  %v105 = vadd.f32 %v36, %v104
  %v106 = vpop.f32.mrf.mxu0
  %107 = vdwg.mxu0
  %108 = vst [vmem:[%s3] sm:$0xff] %v105
  // Predicated region
  $region14: #{linear_probe_forward.1} parent=0 // pred_check
    _
  $region15: #{linear_probe_forward.1} parent=0 // pred_check_branch
    %110 = sbr.rel (0) target = $region17
  $region16: #{linear_probe_forward.1} parent=0 // pred_region
    _
  $region17: #{linear_probe_forward.1} parent=0 // pred_fallthru
    _
  // Predicated region
  $region18: #{linear_probe_forward.1} parent=0 // pred_check
    _
  $region19: #{linear_probe_forward.1} parent=0 // pred_check_branch
    %112 = sbr.rel (0) target = $region21
  $region20: #{linear_probe_forward.1} parent=0 // pred_region
    _
  $region21: #{linear_probe_forward.1} parent=0 // pred_fallthru
    _

</llo_original>
